<compile_context>
chip_gen: v7x
topology: tpu7x:2x2x1
jax: 0.10.0
libtpu: 0.0.40
codegen_flags: <defaults>
</compile_context>

<pallas_src>
import jax
import jax.numpy as jnp
from jax.experimental import pallas as pl
from jax.experimental.pallas import tpu as pltpu


def _pick_tile(dim: int, cap: int, align: int) -> int:
    """Largest tile that divides `dim`, is <= cap, and is a multiple of `align`
    (or the full dim, which always satisfies the TPU (8,128) block rule)."""
    if dim <= cap:
        return dim
    t = (cap // align) * align
    while t >= align:
        if dim % t == 0:
            return t
        t -= align
    return dim  # fallback: single full-dim block


def _activated_linear_kernel(x_ref, w_ref, betas_ref, hyper_ref, o_ref, acc_ref):
    k = pl.program_id(2)

    @pl.when(k == 0)
    def _init():
        acc_ref[...] = jnp.zeros_like(acc_ref)

    # MXU: (tm, tk) @ (tk, tn) -> f32 accumulator.
    acc_ref[...] += jnp.dot(
        x_ref[...], w_ref[...], preferred_element_type=jnp.float32
    )

    @pl.when(k == pl.num_programs(2) - 1)
    def _finalize():
        w_h = hyper_ref[0]  # hyper Linear(1,1) weight (SMEM scalar)
        b_h = hyper_ref[1]  # hyper Linear(1,1) bias   (SMEM scalar)
        scale = betas_ref[...].astype(jnp.float32) * w_h + b_h      # (tm, 1), f32
        o_ref[...] = (scale * acc_ref[...]).astype(o_ref.dtype)


def activated_linear(x, w_t, betas, w_hyper, b_hyper, *,
                     mxu_dtype=None, out_dtype=None,
                     tm_cap=256, tn_cap=512, tk_cap=512):
    """x: (B, C_in); w_t: (C_in, C_out) weight stored pre-transposed (offline);
    betas: (B, 1); w_hyper / b_hyper: scalars of the Linear(1, 1) hyper network.
    mxu_dtype=jnp.bfloat16 casts the matmul operands to bf16 (f32 accumulation kept)."""
    B, C_in = x.shape
    k_dim, C_out = w_t.shape
    assert k_dim == C_in, "w_t must be (C_in, C_out)"
    assert betas.shape == (B, 1)

    if out_dtype is None:
        out_dtype = x.dtype
    if mxu_dtype is not None:
        x = x.astype(mxu_dtype)
        w_t = w_t.astype(mxu_dtype)

    tm = _pick_tile(B, tm_cap, 8)
    tn = _pick_tile(C_out, tn_cap, 128)
    tk = _pick_tile(C_in, tk_cap, 128)
    grid = (B // tm, C_out // tn, C_in // tk)

    hyper = jnp.asarray([w_hyper, b_hyper], dtype=jnp.float32)  # (2,) 1-D SMEM scalars

    bytes_accessed = int(
        x.size * x.dtype.itemsize
        + w_t.size * w_t.dtype.itemsize
        + betas.size * betas.dtype.itemsize
        + B * C_out * jnp.dtype(out_dtype).itemsize
    )
    cost = pl.CostEstimate(
        flops=2 * B * C_in * C_out + 3 * B * C_out,
        transcendentals=0,
        bytes_accessed=bytes_accessed,
    )

    grid_spec = pltpu.PrefetchScalarGridSpec(
        num_scalar_prefetch=0,
        grid=grid,
        in_specs=[
            pl.BlockSpec((tm, tk), lambda i, j, k: (i, k)),       # x tile
            pl.BlockSpec((tk, tn), lambda i, j, k: (k, j)),       # W tile (batch-independent)
            pl.BlockSpec((tm, 1), lambda i, j, k: (i, 0)),        # betas tile
            pl.BlockSpec(memory_space=pltpu.MemorySpace.SMEM),    # hyper scalars
        ],
        out_specs=pl.BlockSpec((tm, tn), lambda i, j, k: (i, j)),
        scratch_shapes=[pltpu.VMEM((tm, tn), jnp.float32)],
    )

    return pl.pallas_call(
        _activated_linear_kernel,
        out_shape=jax.ShapeDtypeStruct((B, C_out), out_dtype),
        grid_spec=grid_spec,
        compiler_params=pltpu.CompilerParams(
            dimension_semantics=("parallel", "parallel", "arbitrary")),
        cost_estimate=cost,
    )(x, w_t, betas, hyper)


if __name__ == "__main__":
    key = jax.random.PRNGKey(0)
    k_x, k_b, k_wpre, k_wh, k_bh, k_x2, k_b2, k_w2 = jax.random.split(key, 8)

    # --- small shapes consistent with ActivatedLinear(in_channels=32, out_channels=128) ---
    B, C_in, C_out = 8, 32, 128

    # pre.weight: xavier_uniform over (C_out, C_in) (PyTorch layout)
    bound_pre = (6.0 / (C_in + C_out)) ** 0.5
    w_pre = jax.random.uniform(k_wpre, (C_out, C_in), jnp.float32, -bound_pre, bound_pre)
    # Store the weight pre-transposed ONCE (parameter layout) -> no per-call HBM transpose.
    w_t = jnp.transpose(w_pre)

    # hyper Linear(1,1): xavier_uniform weight, default bias init U(-1, 1) (fan_in=1)
    bound_h = (6.0 / 2.0) ** 0.5
    w_hyper = jax.random.uniform(k_wh, (), jnp.float32, -bound_h, bound_h)
    b_hyper = jax.random.uniform(k_bh, (), jnp.float32, -1.0, 1.0)

    x = jax.random.normal(k_x, (B, C_in), jnp.float32)
    betas = jax.random.normal(k_b, (B, 1), jnp.float32)

    out = jax.block_until_ready(activated_linear(x, w_t, betas, w_hyper, b_hyper))
    ref = (betas * w_hyper + b_hyper) * (x @ w_pre.T)
    assert out.shape == (B, C_out)
    assert jnp.allclose(out, ref, atol=1e-5, rtol=1e-5), "f32 single-tile mismatch"

    # --- exercise the multi-tile grid (M/N tiling + K-reduction accumulator) ---
    B2, C_in2, C_out2 = 512, 256, 512
    x2 = jax.random.normal(k_x2, (B2, C_in2), jnp.float32)
    betas2 = jax.random.normal(k_b2, (B2, 1), jnp.float32)
    bound2 = (6.0 / (C_in2 + C_out2)) ** 0.5
    w_t2 = jax.random.uniform(k_w2, (C_in2, C_out2), jnp.float32, -bound2, bound2)

    out2 = jax.block_until_ready(
        activated_linear(x2, w_t2, betas2, w_hyper, b_hyper,
                         tm_cap=128, tn_cap=256, tk_cap=128))
    y2 = jnp.dot(x2, w_t2, precision=jax.lax.Precision.HIGHEST)
    ref2 = (betas2 * w_hyper + b_hyper) * y2
    assert jnp.allclose(out2, ref2, atol=1e-4, rtol=1e-4), "f32 multi-tile mismatch"

    # --- bf16-MXU path: operands in bf16, f32 accumulation + f32 hyper-scale ---
    out3 = jax.block_until_ready(
        activated_linear(x2, w_t2, betas2, w_hyper, b_hyper,
                         mxu_dtype=jnp.bfloat16, tm_cap=128, tn_cap=256, tk_cap=128))
    assert jnp.allclose(out3, ref2, atol=5e-2, rtol=5e-2), "bf16 MXU mismatch"

    print("KERNEL_OK")
</pallas_src>

<mosaic_0001>
module attributes {stable_mosaic.version = 11 : i64} {
  func.func @_activated_linear_kernel(%arg0: i32, %arg1: i32, %arg2: i32, %arg3: memref<8x32xf32, #tpu.memory_space<vmem>>, %arg4: memref<32x128xf32, #tpu.memory_space<vmem>>, %arg5: memref<8x1xf32, #tpu.memory_space<vmem>>, %arg6: memref<2xf32, #tpu.memory_space<smem>>, %arg7: memref<8x128xf32, #tpu.memory_space<vmem>>, %arg8: memref<8x128xf32, #tpu.memory_space<vmem>>) attributes {dimension_semantics = [#tpu.dimension_semantics<parallel>, #tpu.dimension_semantics<parallel>, #tpu.dimension_semantics<arbitrary>], iteration_bounds = array<i64: 1, 1, 1>, scalar_prefetch = 0 : i64, scratch_operands = 1 : i64, tpu.core_type = #tpu.core_type<tc>, window_params = [{transform_indices = @transform_0, window_bounds = array<i64: 8, 32>}, {transform_indices = @transform_1, window_bounds = array<i64: 32, 128>}, {transform_indices = @transform_2, window_bounds = array<i64: 8, 1>}, {transform_indices = @transform_3, window_bounds = array<i64: 2>}, {transform_indices = @transform_4, window_bounds = array<i64: 8, 128>}]} {
    %c0_i32 = arith.constant 0 : i32
    %0 = arith.cmpi eq, %arg2, %c0_i32 : i32
    %1 = arith.extui %0 : i1 to i32
    %c0_i32_0 = arith.constant 0 : i32
    %2 = arith.cmpi ne, %1, %c0_i32_0 : i32
    scf.if %2 {
      %cst_10 = arith.constant 0.000000e+00 : f32
      %12 = vector.broadcast %cst_10 : f32 to vector<8x128xf32>
      %c0_11 = arith.constant 0 : index
      %c0_12 = arith.constant 0 : index
      %13 = vector.load %arg8[%c0_11, %c0_12] : memref<8x128xf32, #tpu.memory_space<vmem>>, vector<8x128xf32>
      tpu.vector_store %arg8[%c0_11, %c0_12], %12 {strides = array<i32>} : memref<8x128xf32, #tpu.memory_space<vmem>>, vector<8x128xf32>,
    } else {
    }
    %c0 = arith.constant 0 : index
    %c0_1 = arith.constant 0 : index
    %3 = vector.load %arg8[%c0, %c0_1] : memref<8x128xf32, #tpu.memory_space<vmem>>, vector<8x128xf32>
    %c0_2 = arith.constant 0 : index
    %c0_3 = arith.constant 0 : index
    %4 = vector.load %arg3[%c0_2, %c0_3] : memref<8x32xf32, #tpu.memory_space<vmem>>, vector<8x32xf32>
    %c0_4 = arith.constant 0 : index
    %c0_5 = arith.constant 0 : index
    %5 = vector.load %arg4[%c0_4, %c0_5] : memref<32x128xf32, #tpu.memory_space<vmem>>, vector<32x128xf32>
    %cst = arith.constant dense<0.000000e+00> : vector<8x128xf32>
    %6 = tpu.matmul %4, %5, %cst {dimension_numbers = #tpu.dot_dimension_numbers<[1], [0], [0], [1], [0, 0, 1, 1], [], []>} : vector<8x32xf32>, vector<32x128xf32>, vector<8x128xf32> -> vector<8x128xf32>
    %7 = arith.addf %3, %6 : vector<8x128xf32>
    %c0_6 = arith.constant 0 : index
    %c0_7 = arith.constant 0 : index
    %8 = vector.load %arg8[%c0_6, %c0_7] : memref<8x128xf32, #tpu.memory_space<vmem>>, vector<8x128xf32>
    tpu.vector_store %arg8[%c0_6, %c0_7], %7 {strides = array<i32>} : memref<8x128xf32, #tpu.memory_space<vmem>>, vector<8x128xf32>,
    %c0_i32_8 = arith.constant 0 : i32
    %9 = arith.cmpi eq, %arg2, %c0_i32_8 : i32
    %10 = arith.extui %9 : i1 to i32
    %c0_i32_9 = arith.constant 0 : i32
    %11 = arith.cmpi ne, %10, %c0_i32_9 : i32
    scf.if %11 {
      %c0_10 = arith.constant 0 : index
      %12 = memref.load %arg6[%c0_10] : memref<2xf32, #tpu.memory_space<smem>>
      %c1 = arith.constant 1 : index
      %13 = memref.load %arg6[%c1] : memref<2xf32, #tpu.memory_space<smem>>
      %c0_11 = arith.constant 0 : index
      %c0_12 = arith.constant 0 : index
      %14 = vector.load %arg5[%c0_11, %c0_12] : memref<8x1xf32, #tpu.memory_space<vmem>>, vector<8x1xf32>
      %15 = vector.broadcast %12 : f32 to vector<8x1xf32>
      %16 = arith.mulf %14, %15 : vector<8x1xf32>
      %17 = vector.broadcast %13 : f32 to vector<8x1xf32>
      %18 = arith.addf %16, %17 : vector<8x1xf32>
      %c0_13 = arith.constant 0 : index
      %c0_14 = arith.constant 0 : index
      %19 = vector.load %arg8[%c0_13, %c0_14] : memref<8x128xf32, #tpu.memory_space<vmem>>, vector<8x128xf32>
      %20 = vector.broadcast %18 : vector<8x1xf32> to vector<8x128xf32>
      %21 = arith.mulf %20, %19 : vector<8x128xf32>
      %c0_15 = arith.constant 0 : index
      %c0_16 = arith.constant 0 : index
      %22 = vector.load %arg7[%c0_15, %c0_16] : memref<8x128xf32, #tpu.memory_space<vmem>>, vector<8x128xf32>
      tpu.vector_store %arg7[%c0_15, %c0_16], %21 {strides = array<i32>} : memref<8x128xf32, #tpu.memory_space<vmem>>, vector<8x128xf32>,
    } else {
    }
    return
  }
  func.func @transform_0(%arg0: i32, %arg1: i32, %arg2: i32) -> (i32, i32) {
    %c0_i32 = arith.constant 0 : i32
    return %arg0, %arg2 : i32, i32
  }
  func.func @transform_1(%arg0: i32, %arg1: i32, %arg2: i32) -> (i32, i32) {
    %c0_i32 = arith.constant 0 : i32
    return %arg2, %arg1 : i32, i32
  }
  func.func @transform_2(%arg0: i32, %arg1: i32, %arg2: i32) -> (i32, i32) {
    %c0_i32 = arith.constant 0 : i32
    %c0_i32_0 = arith.constant 0 : i32
    return %arg0, %c0_i32 : i32, i32
  }
  func.func @transform_3(%arg0: i32, %arg1: i32, %arg2: i32) -> i32 {
    %c0_i32 = arith.constant 0 : i32
    %c0_i32_0 = arith.constant 0 : i32
    return %c0_i32 : i32
  }
  func.func @transform_4(%arg0: i32, %arg1: i32, %arg2: i32) -> (i32, i32) {
    %c0_i32 = arith.constant 0 : i32
    return %arg0, %arg1 : i32, i32
  }
}

</mosaic_0001>

<llo_original>
// kernel: tpu_custom_call.1
$region0: #{tpu_custom_call.1}
  #allocation0 [shape = 'u32[]', space=smem, size = 0x4, offset = 0x4, fixed_abs, tag = 'smem constant byte address 0x4 - core index']
  #allocation1 [shape = 'u32[144,128]{1,0:T(1,128)}', space=vmem, size = 0x12000, scoped, tag = 'internal scratch']
  #allocation2 [shape = 'f32[8,128]{1,0:T(8,128)}', space=vmem, size = 0x1000, scoped, tag = 'scratch operand']
  %s0 = inlined_call_operand.vmem [shape: f32[8,32], index: 0, kind: input, shape index: {}]
  %s1 = inlined_call_operand.hbm [shape: f32[32,128], index: 1, kind: input, shape index: {}]
  %s2 = inlined_call_operand.vmem [shape: f32[8,1], index: 2, kind: input, shape index: {}]
  %s3 = inlined_call_operand.vmem [shape: f32[2], index: 3, kind: input, shape index: {}]
  %s4 = inlined_call_operand.hbm [shape: f32[8,128], index: 4, kind: output, shape index: {}]
  %s5 = sld [smem:[#allocation0]]
  $region42: #{tpu_custom_call.1} parent=0
    _
  %s7 = ssub.s32 1, %s5
  %s8 = scalar_select 0, %s7, %s5
  $region1: #{tpu_custom_call.1} parent=0
    #allocation3 [shape = 'u8[16384]{0}', space=vmem, size = 0x4000, scoped, tag = 'input window, operand 1, single buffered']
    #allocation4 [shape = 's32[1]{0}', space=sflag, size = 0x4, scoped, tag = 'scoped memory for tpu_custom_call.1']
    #allocation5 [shape = 's32[1]{0}', space=sflag, size = 0x4, scoped, tag = 'scoped memory for tpu_custom_call.1']
    #allocation6 [shape = 's32[1]{0}', space=sflag, size = 0x4, scoped, tag = 'scoped memory for tpu_custom_call.1']
    #allocation7 [shape = 'u8[512]{0}', space=smem, size = 0x200, scoped, tag = 'input window, operand 3, single buffered']
    #allocation8 [shape = 'u8[4096]{0}', space=vmem, size = 0x1000, scoped, tag = 'output window, operand 0, single buffered']
    %9 = vsyncpa [#allocation4], 0
    %10 = vsyncpa [#allocation6], 0
    %11 = vsyncpa [#allocation5], 0
    // Predicated region
    $region2: #{tpu_custom_call.1} parent=1 // pred_check
      _
    $region3: #{tpu_custom_call.1} parent=1 // pred_check_branch
      %13 = sbr.rel (0) target = $region5
    $region4: #{tpu_custom_call.1} parent=1 // pred_region
      _
    $region5: #{tpu_custom_call.1} parent=1 // pred_fallthru
      _
    // Predicated region
    $region6: #{tpu_custom_call.1} parent=1 // pred_check
      _
    $region7: #{tpu_custom_call.1} parent=1 // pred_check_branch
      %15 = sbr.rel (0) target = $region9
    $region8: #{tpu_custom_call.1} parent=1 // pred_region
      %s17 = ssub.s32 512, 512
      %18 = vsyncadd [#allocation4], %s17
      %s19 = sshll.u32 [#allocation3], 4
      %s20 = int_to_ptr.vmem [resolvable:$true] %s19
      %25 = dma.hbm_to_vmem [thread:$0]  %s1, 512, %s20, [#allocation4], 128, 128, 8
    $region9: #{tpu_custom_call.1} parent=1 // pred_fallthru
      _
    // Predicated region
    $region10: #{tpu_custom_call.1} parent=1 // pred_check
      _
    $region11: #{tpu_custom_call.1} parent=1 // pred_check_branch
      %27 = sbr.rel (0) target = $region13
    $region12: #{tpu_custom_call.1} parent=1 // pred_region
      _
    $region13: #{tpu_custom_call.1} parent=1 // pred_fallthru
      _
    // Predicated region
    $region14: #{tpu_custom_call.1} parent=1 // pred_check
      _
    $region15: #{tpu_custom_call.1} parent=1 // pred_check_branch
      %29 = sbr.rel (0) target = $region17
    $region16: #{tpu_custom_call.1} parent=1 // pred_region
      %s31 = ssub.s32 16, 16
      %32 = vsyncadd [#allocation6], %s31
      %s34 = sshll.u32 %s3, 4
      %s35 = int_to_ptr.vmem [resolvable:$true] %s34
      %37 = dma.vmem_to_smem %s35, 16, [#allocation7], [#allocation6]
    $region17: #{tpu_custom_call.1} parent=1 // pred_fallthru
      _
    // Predicated region
    $region18: #{tpu_custom_call.1} parent=1 // pred_check
      _
    $region19: #{tpu_custom_call.1} parent=1 // pred_check_branch
      %39 = sbr.rel (0) target = $region21
    $region20: #{tpu_custom_call.1} parent=1 // pred_region
      %40 = dma.done [#allocation4], 512
    $region21: #{tpu_custom_call.1} parent=1 // pred_fallthru
      _
    // Predicated region
    $region22: #{tpu_custom_call.1} parent=1 // pred_check
      _
    $region23: #{tpu_custom_call.1} parent=1 // pred_check_branch
      %42 = sbr.rel (0) target = $region25
    $region24: #{tpu_custom_call.1} parent=1 // pred_region
      %43 = dma.done [#allocation6], 16
    $region25: #{tpu_custom_call.1} parent=1 // pred_fallthru
      _
    %44 = sfence
    %p45 = scmp.eq.s32.totalorder 0, 0
    // Predicated region
    $region26: #{tpu_custom_call.1} parent=1 // pred_check
      %p46 = pneg %p45
    $region27: #{tpu_custom_call.1} parent=1 // pred_check_branch
      %48 = sbr.rel (%p46) target = $region29
    $region28: #{tpu_custom_call.1} parent=1 // pred_region
      %49 = vst [vmem:[#allocation2] sm:$0xff] 0.0
    $region29: #{tpu_custom_call.1} parent=1 // pred_fallthru
      _
    %v50 = vld [vmem:[#allocation2] sm:$0xff]
    %v51 = vld [vmem:[%s0] sm:$0xff]
    %v52 = vld [vmem:[#allocation3] sm:$0xff]
    %v53 = vld [vmem:[#allocation3 + $0x8] sm:$0xff]
    %v54 = vld [vmem:[#allocation3 + $0x10] sm:$0xff]
    %v55 = vld [vmem:[#allocation3 + $0x18] sm:$0xff]
    %vm56 = vcmask 261120
    %v58 = vsel %vm56, %v51, 0
    %60 = vmatprep.subr.mxu0 0.0
    %61 = vmatpush1.msra.mxu0 %v52
    %62 = vmatprep.subr.mxu0 0.0
    %63 = vmatpush1.msra.mxu0 %v53
    %64 = vmatprep.subr.mxu0 0.0
    %65 = vmatpush1.msra.mxu0 %v54
    %66 = vmatprep.subr.mxu0 0.0
    %67 = vmatpush1.msra.mxu0 %v55
    %68 = vmatprep.subr.mxu0 0.0
    %69 = vmatpush1.msra.mxu0 0.0
    %70 = vmatprep.subr.mxu0 0.0
    %71 = vmatpush1.msra.mxu0 0.0
    %72 = vmatprep.subr.mxu0 0.0
    %73 = vmatpush1.msra.mxu0 0.0
    %74 = vmatprep.subr.mxu0 0.0
    %75 = vmatpush1.msra.mxu0 0.0
    %76 = vmatprep.subr.mxu0 0.0
    %77 = vmatpush1.msra.mxu0 0.0
    %78 = vmatprep.subr.mxu0 0.0
    %79 = vmatpush1.msra.mxu0 0.0
    %80 = vmatprep.subr.mxu0 0.0
    %81 = vmatpush1.msra.mxu0 0.0
    %82 = vmatprep.subr.mxu0 0.0
    %83 = vmatpush1.msra.mxu0 0.0
    %84 = vmatprep.subr.mxu0 0.0
    %85 = vmatpush1.msra.mxu0 0.0
    %86 = vmatprep.subr.mxu0 0.0
    %87 = vmatpush1.msra.mxu0 0.0
    %88 = vmatprep.subr.mxu0 0.0
    %89 = vmatpush1.msra.mxu0 0.0
    %90 = vmatprep.subr.mxu0 0.0
    %91 = vmatpush1.msra.mxu0 0.0
    %92 = vmatprep.subr.mxu0 0.0
    %93 = vmatpush1.msra.mxu0 0.0
    %94 = vmatprep.subr.mxu0 0.0
    %95 = vmatpush1.msra.mxu0 0.0
    %96 = vmatprep.subr.mxu0 0.0
    %97 = vmatpush1.msra.mxu0 0.0
    %98 = vmatprep.subr.mxu0 0.0
    %99 = vmatpush1.msra.mxu0 0.0
    %100 = vmatprep.subr.mxu0 0.0
    %101 = vmatpush1.msra.mxu0 0.0
    %102 = vmatprep.subr.mxu0 0.0
    %103 = vmatpush1.msra.mxu0 0.0
    %104 = vmatprep.subr.mxu0 0.0
    %105 = vmatpush1.msra.mxu0 0.0
    %106 = vmatprep.subr.mxu0 0.0
    %107 = vmatpush1.msra.mxu0 0.0
    %108 = vmatprep.subr.mxu0 0.0
    %109 = vmatpush1.msra.mxu0 0.0
    %110 = vmatprep.subr.mxu0 0.0
    %111 = vmatpush1.msra.mxu0 0.0
    %112 = vmatprep.subr.mxu0 0.0
    %113 = vmatpush1.msra.mxu0 0.0
    %114 = vmatprep.subr.mxu0 0.0
    %115 = vmatpush1.msra.mxu0 0.0
    %116 = vmatprep.subr.mxu0 0.0
    %117 = vmatpush1.msra.mxu0 0.0
    %118 = vmatprep.subr.mxu0 0.0
    %119 = vmatpush1.msra.mxu0 0.0
    %120 = vmatprep.subr.mxu0 0.0
    %121 = vmatpush1.msra.mxu0 0.0
    %122 = vmatprep.subr.mxu0 0.0
    %123 = vmatpush1.msra.mxu0 0.0
    %124 = vmatprep.mubr.f32.mxu0 0.0
    %125 = vmatmul.mubr.f32.gmra.mrb[0].mxu0 %v58
    %v126 = vpop.f32.mrb[0].mxu0
    %v127 = vadd.f32 0.0, %v126
    %v128 = vpop.f32.mrb[0].mxu0
    %129 = vdwg.mxu0
    %v130 = vadd.f32 %v50, %v127
    %131 = vst [vmem:[#allocation2] sm:$0xff] %v130
    // Predicated region
    $region30: #{tpu_custom_call.1} parent=1 // pred_check
      %p132 = pneg %p45
    $region31: #{tpu_custom_call.1} parent=1 // pred_check_branch
      %134 = sbr.rel (%p132) target = $region33
    $region32: #{tpu_custom_call.1} parent=1 // pred_region
      %s135 = sld [smem:[#allocation7]]
      %s136 = sld [smem:[#allocation7 + $0x1]]
      %v137 = vld [vmem:[%s2] sm:$0xff]
      %v138 = vstv %s135
      %v139 = vmul.f32 %v137, %v138
      %v140 = vstv %s136
      %v141 = vadd.f32 %v139, %v140
      %v142 = vld [vmem:[#allocation2] sm:$0xff]
      %144 = vset.pattern.permute.xlu0 0
      %145 = vperm.xlu0 %144, %v141
      %v146 = vpop.permute.xlu0 %145
      %v148 = vmul.f32 %v146, %v142
      %149 = vst [vmem:[#allocation8] sm:$0xff] %v148
    $region33: #{tpu_custom_call.1} parent=1 // pred_fallthru
      _
    // Predicated region
    $region34: #{tpu_custom_call.1} parent=1 // pred_check
      _
    $region35: #{tpu_custom_call.1} parent=1 // pred_check_branch
      %151 = sbr.rel (0) target = $region37
    $region36: #{tpu_custom_call.1} parent=1 // pred_region
      %s153 = ssub.s32 128, 128
      %154 = vsyncadd [#allocation5], %s153
      %s156 = sshll.u32 [#allocation8], 4
      %s157 = int_to_ptr.vmem [resolvable:$true] %s156
      %159 = dma.vmem_to_hbm [thread:$0]  %s157, 128, %s4, [#allocation5]
    $region37: #{tpu_custom_call.1} parent=1 // pred_fallthru
      _
    // Predicated region
    $region38: #{tpu_custom_call.1} parent=1 // pred_check
      _
    $region39: #{tpu_custom_call.1} parent=1 // pred_check_branch
      %161 = sbr.rel (0) target = $region41
    $region40: #{tpu_custom_call.1} parent=1 // pred_region
      %162 = dma.done [#allocation5], 128
    $region41: #{tpu_custom_call.1} parent=1 // pred_fallthru
      _
    %163 = vsyncpa [#allocation4], 1
    %164 = vsyncpa [#allocation5], 1
    %165 = vsyncpa [#allocation6], 1

</llo_original>
